<compile_context>
chip_gen: v7x
topology: tpu7x:2x2x1
jax: 0.10.0
libtpu: 0.0.40
codegen_flags: <defaults>
</compile_context>

<pallas_src>
import functools

import jax
import jax.numpy as jnp
from jax.experimental import pallas as pl
from jax.experimental.pallas import tpu as pltpu

CLIPRANGE = 5.0
LN_EPS = 1e-5  # PyTorch nn.LayerNorm default


def _round_up(x, m):
    return (x + m - 1) // m * m


def _layernorm(h, gamma, beta):
    # Single-pass statistics: var = E[h^2] - mu^2 (both lane reductions are
    # independent -> they pipeline through the XLU instead of serializing).
    mu = jnp.mean(h, axis=-1, keepdims=True)
    ms = jnp.mean(h * h, axis=-1, keepdims=True)
    var = ms - mu * mu
    return (h - mu) * jax.lax.rsqrt(var + LN_EPS) * gamma + beta


def pos_item_kernel(x_ref, w_emb_ref, vec_ref, w1_ref, b1_ref, w2_ref, o_ref,
                    *, mask_feature):
    # x_ref: (TM, d_in) tile of item rows (f32).
    x = x_ref[...]
    d_in = x.shape[1]

    # Packed parameter vectors: rows 0..5 = b_emb, ln0_g, ln0_b, b2, ln1_g, ln1_b.
    vecs = vec_ref[...]
    b_emb, g0, bb0 = vecs[0:1, :], vecs[1:2, :], vecs[2:3, :]
    b2, g1, bb1 = vecs[3:4, :], vecs[4:5, :], vecs[5:6, :]

    # select computed in-kernel from the tile (no separate streamed mask input).
    sel = x[:, mask_feature:mask_feature + 1] != 0.0

    # --- InputEmbedding ---
    # InputNorm with count==0 buffers -> clamp only.
    hc = jnp.clip(x, -CLIPRANGE, CLIPRANGE)
    w_emb = w_emb_ref[...]                      # (d_in, d_model) f32
    if d_in <= 16:
        # K is tiny: do the "matmul" as d_in rank-1 VPU updates so the MXU is
        # not wasted on a K=6 pass that costs the same pushes as a K=128 one.
        h = b_emb + hc[:, 0:1] * w_emb[0:1, :]
        for k in range(1, d_in):
            h = h + hc[:, k:k + 1] * w_emb[k:k + 1, :]
    else:
        h = jnp.dot(hc.astype(jnp.bfloat16), w_emb.astype(jnp.bfloat16),
                    preferred_element_type=jnp.float32) + b_emb
    h = jnp.maximum(h, 0.0)
    h = _layernorm(h, g0, bb0)

    # --- FFResblock --- (bf16 operands on the MXU, f32 accumulation)
    h1 = jnp.dot(h.astype(jnp.bfloat16), w1_ref[...],
                 preferred_element_type=jnp.float32) + b1_ref[...]
    h1 = jnp.maximum(h1, 0.0)
    h2 = jnp.dot(h1.astype(jnp.bfloat16), w2_ref[...],
                 preferred_element_type=jnp.float32) + b2
    h = _layernorm(h + h2, g1, bb1)

    # SparseSequence.pad equivalent: exact zeros at inactive rows.
    # jnp.where (not multiply) so a non-finite value can never leak a NaN.
    o_ref[...] = jnp.where(sel, h, 0.0)


def _vmem_limit_bytes(tm_eff, d_in, d_model, d_ff):
    """VMEM budget: (8,128)-padded tiles, double-buffered, + intermediates."""
    def tile(r, c, bpe=4):
        return _round_up(max(r, 1), 8) * _round_up(c, 128) * bpe

    est = (2 * tile(tm_eff, d_in)                       # x tile (lane-pads to 128!)
           + 2 * tile(tm_eff, d_model)                  # output tile
           + 2 * (tile(d_in, d_model) + tile(8, d_model) + tile(1, d_ff))  # f32 params
           + 2 * (tile(d_model, d_ff, 2) + tile(d_ff, d_model, 2))         # bf16 weights
           + 3 * tile(tm_eff, max(d_model, d_ff)))      # live intermediates
    # Cap well under the 64 MiB physical VMEM of a v7x TensorCore.
    return min(est + (8 << 20), 48 << 20)


@functools.partial(jax.jit, static_argnames=("tm", "mask_feature"))
def _run_kernel(x_rows, params, *, tm, mask_feature):
    n_rows, d_in = x_rows.shape
    d_model = params["w_emb"].shape[1]
    d_ff = params["w1"].shape[1]

    # Tile choice: big default (4096) to amortize the ~0.35us/step grid
    # overhead, but never fewer than 2 grid steps when the problem would fit
    # in a single tile, so both v7x TensorCores get work. Ragged tails are
    # handled by Pallas partial-block masking (no wrapper-side pad copy).
    half = _round_up(max(-(-n_rows // 2), 8), 8)
    tm_eff = max(min(tm, half), 8)
    grid = (pl.cdiv(n_rows, tm_eff),)

    # Pack the six (1, d_model) vectors into one (8, d_model) slab.
    vecs = jnp.concatenate(
        [params["b_emb"], params["ln0_g"], params["ln0_b"],
         params["b2"], params["ln1_g"], params["ln1_b"],
         jnp.zeros((2, d_model), jnp.float32)], axis=0)

    w1_bf = params["w1"].astype(jnp.bfloat16)
    w2_bf = params["w2"].astype(jnp.bfloat16)

    row_spec = lambda c: pl.BlockSpec((tm_eff, c), lambda i: (i, 0))
    full_spec = lambda r, c: pl.BlockSpec((r, c), lambda i: (0, 0))

    flops = 2 * n_rows * (d_in * d_model + 2 * d_model * d_ff)
    bytes_accessed = (4 * n_rows * (d_in + d_model)
                      + 4 * (d_in * d_model + 8 * d_model + d_ff)
                      + 2 * (2 * d_model * d_ff))

    kernel = functools.partial(pos_item_kernel, mask_feature=mask_feature)

    return pl.pallas_call(
        kernel,
        out_shape=jax.ShapeDtypeStruct((n_rows, d_model), jnp.float32),
        grid_spec=pltpu.PrefetchScalarGridSpec(
            num_scalar_prefetch=0,
            grid=grid,
            in_specs=[
                row_spec(d_in),              # x rows (streamed)
                full_spec(d_in, d_model),    # w_emb (constant index -> resident)
                full_spec(8, d_model),       # packed bias/gamma/beta slab
                full_spec(d_model, d_ff),    # w1 (bf16)
                full_spec(1, d_ff),          # b1
                full_spec(d_ff, d_model),    # w2 (bf16)
            ],
            out_specs=row_spec(d_model),
        ),
        compiler_params=pltpu.CompilerParams(
            dimension_semantics=("parallel",),
            vmem_limit_bytes=_vmem_limit_bytes(tm_eff, d_in, d_model, d_ff)),
        cost_estimate=pl.CostEstimate(
            flops=flops, transcendentals=2 * n_rows,
            bytes_accessed=bytes_accessed),
    )(x_rows, params["w_emb"], vecs, w1_bf, params["b1"], w2_bf)


def pos_item_block_forward(x, params, *, start, end, count, d_in, mask_feature,
                           tm=4096):
    """Mirrors PosItemBlock.forward(x, privileged=False).

    Args:
      x: (B, F_total) float32.
    Returns:
      (padded, mask):
        padded: (B, count, d_model) float32 — zeros at inactive item slots.
        mask:   (B, count) bool — True where item is inactive (select == False).
    """
    B = x.shape[0]
    x_items = x[:, start:end].reshape(B, count, d_in)
    select = x_items[:, :, mask_feature] != 0
    mask = jnp.logical_not(select)

    x_rows = x_items.reshape(B * count, d_in).astype(jnp.float32)
    out = _run_kernel(x_rows, params, tm=tm, mask_feature=mask_feature)
    d_model = params["w_emb"].shape[1]
    return out.reshape(B, count, d_model), mask


def init_params(key, d_in, d_model, d_ff):
    """Deterministic synthetic parameters (PyTorch-default-like scales)."""
    ks = jax.random.split(key, 3)

    def lin(k, fan_in, fan_out):
        bound = 1.0 / jnp.sqrt(fan_in)
        kw, kb = jax.random.split(k)
        w = jax.random.uniform(kw, (fan_in, fan_out), jnp.float32, -bound, bound)
        b = jax.random.uniform(kb, (1, fan_out), jnp.float32, -bound, bound)
        return w, b

    w_emb, b_emb = lin(ks[0], d_in, d_model)
    w1, b1 = lin(ks[1], d_model, d_ff)
    w2, b2 = lin(ks[2], d_ff, d_model)
    return {
        "w_emb": w_emb, "b_emb": b_emb,
        "ln0_g": jnp.ones((1, d_model), jnp.float32),
        "ln0_b": jnp.zeros((1, d_model), jnp.float32),
        "w1": w1, "b1": b1,
        "w2": w2, "b2": b2,
        "ln1_g": jnp.ones((1, d_model), jnp.float32),
        "ln1_b": jnp.zeros((1, d_model), jnp.float32),
    }


def reference_forward(x, params, *, start, end, count, d_in, mask_feature):
    """Pure-JAX f32 reference of PosItemBlock.forward for validation."""
    B = x.shape[0]
    x_items = x[:, start:end].reshape(B, count, d_in)
    select = x_items[:, :, mask_feature] != 0
    mask = jnp.logical_not(select)

    h = jnp.clip(x_items, -CLIPRANGE, CLIPRANGE)
    h = jnp.maximum(h @ params["w_emb"] + params["b_emb"], 0.0)
    h = _layernorm(h, params["ln0_g"], params["ln0_b"])
    h1 = jnp.maximum(h @ params["w1"] + params["b1"], 0.0)
    h2 = h1 @ params["w2"] + params["b2"]
    h = _layernorm(h + h2, params["ln1_g"], params["ln1_b"])
    return jnp.where(select[:, :, None], h, 0.0), mask


def _make_example(key, *, B, count, d_in, start, trailing, mask_feature, drop_p):
    end = start + count * d_in
    f_total = end + trailing
    k_x, k_m = jax.random.split(key)
    x = jax.random.normal(k_x, (B, f_total), jnp.float32)
    # Zero out the mask feature of some items so that `select` has both values.
    item_view = x[:, start:end].reshape(B, count, d_in)
    drop = jax.random.bernoulli(k_m, drop_p, (B, count))
    item_view = item_view.at[:, :, mask_feature].set(
        jnp.where(drop, 0.0, item_view[:, :, mask_feature]))
    x = x.at[:, start:end].set(item_view.reshape(B, count * d_in))
    return x, end


def _check(x, params, *, start, end, count, d_in, mask_feature, d_model):
    B = x.shape[0]
    out, mask = pos_item_block_forward(
        x, params, start=start, end=end, count=count, d_in=d_in,
        mask_feature=mask_feature)
    out = jax.block_until_ready(out)

    ref_out, ref_mask = reference_forward(
        x, params, start=start, end=end, count=count, d_in=d_in,
        mask_feature=mask_feature)

    assert out.shape == (B, count, d_model)
    assert mask.shape == (B, count)
    assert bool(jnp.all(mask == ref_mask))
    # Tolerance loosened vs. a pure-f32 kernel: the FFResblock matmuls use
    # bf16 operands (f32 accumulation), per the performance review.
    assert bool(jnp.allclose(out, ref_out, atol=3e-2, rtol=3e-2))
    # Inactive rows must be exactly zero (SparseSequence.pad semantics).
    assert bool(jnp.all(jnp.where(mask[:, :, None], out == 0.0, True)))


if __name__ == "__main__":
    # Small shapes implied by the module: a flat observation vector per batch
    # element, from which [start:end] holds `count` items of `d_in` features.
    d_in = 6
    d_model = 128   # lane-dense output blocks (multiple of 128 lanes)
    d_ff = 256
    mask_feature = 0

    key = jax.random.PRNGKey(0)
    k_p, k_x1, k_x2 = jax.random.split(key, 3)
    params = init_params(k_p, d_in, d_model, d_ff)

    # Config 1: 16 rows -> two full 8-row tiles (exercises the >=2-step grid).
    B1, count1, start1 = 2, 8, 2
    x1, end1 = _make_example(k_x1, B=B1, count=count1, d_in=d_in, start=start1,
                             trailing=4, mask_feature=mask_feature, drop_p=0.4)
    _check(x1, params, start=start1, end=end1, count=count1, d_in=d_in,
           mask_feature=mask_feature, d_model=d_model)

    # Config 2: ragged row count (33 rows) exercises the partial-block path
    # (24 + 9 rows) with no wrapper-side pad copy.
    B2, count2, start2 = 3, 11, 1
    x2, end2 = _make_example(k_x2, B=B2, count=count2, d_in=d_in, start=start2,
                             trailing=3, mask_feature=mask_feature, drop_p=0.5)
    _check(x2, params, start=start2, end=end2, count=count2, d_in=d_in,
           mask_feature=mask_feature, d_model=d_model)

    print("KERNEL_OK")
</pallas_src>

<mosaic_0001>
module attributes {stable_mosaic.version = 11 : i64} {
  func.func @pos_item_kernel(%arg0: i32, %arg1: memref<8x6xf32, #tpu.memory_space<vmem>>, %arg2: memref<6x128xf32, #tpu.memory_space<vmem>>, %arg3: memref<8x128xf32, #tpu.memory_space<vmem>>, %arg4: memref<128x256xbf16, #tpu.memory_space<vmem>>, %arg5: memref<1x256xf32, #tpu.memory_space<vmem>>, %arg6: memref<256x128xbf16, #tpu.memory_space<vmem>>, %arg7: memref<8x128xf32, #tpu.memory_space<vmem>>) attributes {dimension_semantics = [#tpu.dimension_semantics<parallel>], iteration_bounds = array<i64: 2>, scalar_prefetch = 0 : i64, scratch_operands = 0 : i64, tpu.core_type = #tpu.core_type<tc>, window_params = [{transform_indices = @transform_0, window_bounds = array<i64: 8, 6>}, {pipeline_mode = #tpu.pipeline_mode<synchronous>, transform_indices = @transform_1, window_bounds = array<i64: 6, 128>}, {pipeline_mode = #tpu.pipeline_mode<synchronous>, transform_indices = @transform_2, window_bounds = array<i64: 8, 128>}, {pipeline_mode = #tpu.pipeline_mode<synchronous>, transform_indices = @transform_3, window_bounds = array<i64: 128, 256>}, {pipeline_mode = #tpu.pipeline_mode<synchronous>, transform_indices = @transform_4, window_bounds = array<i64: 1, 256>}, {pipeline_mode = #tpu.pipeline_mode<synchronous>, transform_indices = @transform_5, window_bounds = array<i64: 256, 128>}, {transform_indices = @transform_6, window_bounds = array<i64: 8, 128>}]} {
    %c0 = arith.constant 0 : index
    %c0_0 = arith.constant 0 : index
    %0 = vector.load %arg1[%c0, %c0_0] : memref<8x6xf32, #tpu.memory_space<vmem>>, vector<8x6xf32>
    %c0_1 = arith.constant 0 : index
    %c0_2 = arith.constant 0 : index
    %1 = vector.load %arg3[%c0_1, %c0_2] : memref<8x128xf32, #tpu.memory_space<vmem>>, vector<8x128xf32>
    %2 = vector.extract_strided_slice %1 {offsets = [0, 0], sizes = [1, 128], strides = [1, 1]} : vector<8x128xf32> to vector<1x128xf32>
    %3 = vector.extract_strided_slice %1 {offsets = [1, 0], sizes = [1, 128], strides = [1, 1]} : vector<8x128xf32> to vector<1x128xf32>
    %4 = vector.extract_strided_slice %1 {offsets = [2, 0], sizes = [1, 128], strides = [1, 1]} : vector<8x128xf32> to vector<1x128xf32>
    %5 = vector.extract_strided_slice %1 {offsets = [3, 0], sizes = [1, 128], strides = [1, 1]} : vector<8x128xf32> to vector<1x128xf32>
    %6 = vector.extract_strided_slice %1 {offsets = [4, 0], sizes = [1, 128], strides = [1, 1]} : vector<8x128xf32> to vector<1x128xf32>
    %7 = vector.extract_strided_slice %1 {offsets = [5, 0], sizes = [1, 128], strides = [1, 1]} : vector<8x128xf32> to vector<1x128xf32>
    %8 = vector.extract_strided_slice %0 {offsets = [0, 0], sizes = [8, 1], strides = [1, 1]} : vector<8x6xf32> to vector<8x1xf32>
    %cst = arith.constant 0.000000e+00 : f32
    %9 = vector.broadcast %cst : f32 to vector<8x1xf32>
    %10 = arith.cmpf one, %8, %9 : vector<8x1xf32>
    %cst_3 = arith.constant -5.000000e+00 : f32
    %cst_4 = arith.constant 5.000000e+00 : f32
    %11 = vector.broadcast %cst_3 : f32 to vector<8x6xf32>
    %12 = arith.maximumf %11, %0 : vector<8x6xf32>
    %13 = vector.broadcast %cst_4 : f32 to vector<8x6xf32>
    %14 = arith.minimumf %13, %12 : vector<8x6xf32>
    %c0_5 = arith.constant 0 : index
    %c0_6 = arith.constant 0 : index
    %15 = vector.load %arg2[%c0_5, %c0_6] : memref<6x128xf32, #tpu.memory_space<vmem>>, vector<6x128xf32>
    %16 = vector.extract_strided_slice %14 {offsets = [0, 0], sizes = [8, 1], strides = [1, 1]} : vector<8x6xf32> to vector<8x1xf32>
    %17 = vector.extract_strided_slice %15 {offsets = [0, 0], sizes = [1, 128], strides = [1, 1]} : vector<6x128xf32> to vector<1x128xf32>
    %18 = vector.broadcast %16 : vector<8x1xf32> to vector<8x128xf32>
    %19 = vector.broadcast %17 : vector<1x128xf32> to vector<8x128xf32>
    %20 = arith.mulf %18, %19 : vector<8x128xf32>
    %21 = vector.broadcast %2 : vector<1x128xf32> to vector<8x128xf32>
    %22 = arith.addf %21, %20 : vector<8x128xf32>
    %23 = vector.extract_strided_slice %14 {offsets = [0, 1], sizes = [8, 1], strides = [1, 1]} : vector<8x6xf32> to vector<8x1xf32>
    %24 = vector.extract_strided_slice %15 {offsets = [1, 0], sizes = [1, 128], strides = [1, 1]} : vector<6x128xf32> to vector<1x128xf32>
    %25 = vector.broadcast %23 : vector<8x1xf32> to vector<8x128xf32>
    %26 = vector.broadcast %24 : vector<1x128xf32> to vector<8x128xf32>
    %27 = arith.mulf %25, %26 : vector<8x128xf32>
    %28 = arith.addf %22, %27 : vector<8x128xf32>
    %29 = vector.extract_strided_slice %14 {offsets = [0, 2], sizes = [8, 1], strides = [1, 1]} : vector<8x6xf32> to vector<8x1xf32>
    %30 = vector.extract_strided_slice %15 {offsets = [2, 0], sizes = [1, 128], strides = [1, 1]} : vector<6x128xf32> to vector<1x128xf32>
    %31 = vector.broadcast %29 : vector<8x1xf32> to vector<8x128xf32>
    %32 = vector.broadcast %30 : vector<1x128xf32> to vector<8x128xf32>
    %33 = arith.mulf %31, %32 : vector<8x128xf32>
    %34 = arith.addf %28, %33 : vector<8x128xf32>
    %35 = vector.extract_strided_slice %14 {offsets = [0, 3], sizes = [8, 1], strides = [1, 1]} : vector<8x6xf32> to vector<8x1xf32>
    %36 = vector.extract_strided_slice %15 {offsets = [3, 0], sizes = [1, 128], strides = [1, 1]} : vector<6x128xf32> to vector<1x128xf32>
    %37 = vector.broadcast %35 : vector<8x1xf32> to vector<8x128xf32>
    %38 = vector.broadcast %36 : vector<1x128xf32> to vector<8x128xf32>
    %39 = arith.mulf %37, %38 : vector<8x128xf32>
    %40 = arith.addf %34, %39 : vector<8x128xf32>
    %41 = vector.extract_strided_slice %14 {offsets = [0, 4], sizes = [8, 1], strides = [1, 1]} : vector<8x6xf32> to vector<8x1xf32>
    %42 = vector.extract_strided_slice %15 {offsets = [4, 0], sizes = [1, 128], strides = [1, 1]} : vector<6x128xf32> to vector<1x128xf32>
    %43 = vector.broadcast %41 : vector<8x1xf32> to vector<8x128xf32>
    %44 = vector.broadcast %42 : vector<1x128xf32> to vector<8x128xf32>
    %45 = arith.mulf %43, %44 : vector<8x128xf32>
    %46 = arith.addf %40, %45 : vector<8x128xf32>
    %47 = vector.extract_strided_slice %14 {offsets = [0, 5], sizes = [8, 1], strides = [1, 1]} : vector<8x6xf32> to vector<8x1xf32>
    %48 = vector.extract_strided_slice %15 {offsets = [5, 0], sizes = [1, 128], strides = [1, 1]} : vector<6x128xf32> to vector<1x128xf32>
    %49 = vector.broadcast %47 : vector<8x1xf32> to vector<8x128xf32>
    %50 = vector.broadcast %48 : vector<1x128xf32> to vector<8x128xf32>
    %51 = arith.mulf %49, %50 : vector<8x128xf32>
    %52 = arith.addf %46, %51 : vector<8x128xf32>
    %cst_7 = arith.constant 0.000000e+00 : f32
    %53 = vector.broadcast %cst_7 : f32 to vector<8x128xf32>
    %54 = arith.maximumf %52, %53 : vector<8x128xf32>
    %cst_8 = arith.constant dense<0.000000e+00> : vector<8xf32>
    %55 = vector.multi_reduction <add>, %54, %cst_8 [1] : vector<8x128xf32> to vector<8xf32>
    %56 = vector.shape_cast %55 : vector<8xf32> to vector<8x1xf32>
    %cst_9 = arith.constant 1.280000e+02 : f32
    %57 = vector.broadcast %cst_9 : f32 to vector<8x1xf32>
    %58 = arith.divf %56, %57 : vector<8x1xf32>
    %59 = arith.mulf %54, %54 : vector<8x128xf32>
    %cst_10 = arith.constant dense<0.000000e+00> : vector<8xf32>
    %60 = vector.multi_reduction <add>, %59, %cst_10 [1] : vector<8x128xf32> to vector<8xf32>
    %61 = vector.shape_cast %60 : vector<8xf32> to vector<8x1xf32>
    %cst_11 = arith.constant 1.280000e+02 : f32
    %62 = vector.broadcast %cst_11 : f32 to vector<8x1xf32>
    %63 = arith.divf %61, %62 : vector<8x1xf32>
    %64 = arith.mulf %58, %58 : vector<8x1xf32>
    %65 = arith.subf %63, %64 : vector<8x1xf32>
    %66 = vector.broadcast %58 : vector<8x1xf32> to vector<8x128xf32>
    %67 = arith.subf %54, %66 : vector<8x128xf32>
    %cst_12 = arith.constant 9.99999974E-6 : f32
    %68 = vector.broadcast %cst_12 : f32 to vector<8x1xf32>
    %69 = arith.addf %65, %68 : vector<8x1xf32>
    %70 = math.rsqrt %69 : vector<8x1xf32>
    %71 = vector.broadcast %70 : vector<8x1xf32> to vector<8x128xf32>
    %72 = arith.mulf %67, %71 : vector<8x128xf32>
    %73 = vector.broadcast %3 : vector<1x128xf32> to vector<8x128xf32>
    %74 = arith.mulf %72, %73 : vector<8x128xf32>
    %75 = vector.broadcast %4 : vector<1x128xf32> to vector<8x128xf32>
    %76 = arith.addf %74, %75 : vector<8x128xf32>
    %77 = arith.truncf %76 : vector<8x128xf32> to vector<8x128xbf16>
    %c0_13 = arith.constant 0 : index
    %c0_14 = arith.constant 0 : index
    %78 = vector.load %arg4[%c0_13, %c0_14] : memref<128x256xbf16, #tpu.memory_space<vmem>>, vector<128x256xbf16>
    %cst_15 = arith.constant dense<0.000000e+00> : vector<8x256xf32>
    %79 = tpu.matmul %77, %78, %cst_15 {dimension_numbers = #tpu.dot_dimension_numbers<[1], [0], [0], [1], [0, 0, 1, 1], [], []>} : vector<8x128xbf16>, vector<128x256xbf16>, vector<8x256xf32> -> vector<8x256xf32>
    %c0_16 = arith.constant 0 : index
    %c0_17 = arith.constant 0 : index
    %80 = vector.load %arg5[%c0_16, %c0_17] : memref<1x256xf32, #tpu.memory_space<vmem>>, vector<1x256xf32>
    %81 = vector.broadcast %80 : vector<1x256xf32> to vector<8x256xf32>
    %82 = arith.addf %79, %81 : vector<8x256xf32>
    %cst_18 = arith.constant 0.000000e+00 : f32
    %83 = vector.broadcast %cst_18 : f32 to vector<8x256xf32>
    %84 = arith.maximumf %82, %83 : vector<8x256xf32>
    %85 = arith.truncf %84 : vector<8x256xf32> to vector<8x256xbf16>
    %c0_19 = arith.constant 0 : index
    %c0_20 = arith.constant 0 : index
    %86 = vector.load %arg6[%c0_19, %c0_20] : memref<256x128xbf16, #tpu.memory_space<vmem>>, vector<256x128xbf16>
    %cst_21 = arith.constant dense<0.000000e+00> : vector<8x128xf32>
    %87 = tpu.matmul %85, %86, %cst_21 {dimension_numbers = #tpu.dot_dimension_numbers<[1], [0], [0], [1], [0, 0, 1, 1], [], []>} : vector<8x256xbf16>, vector<256x128xbf16>, vector<8x128xf32> -> vector<8x128xf32>
    %88 = vector.broadcast %5 : vector<1x128xf32> to vector<8x128xf32>
    %89 = arith.addf %87, %88 : vector<8x128xf32>
    %90 = arith.addf %76, %89 : vector<8x128xf32>
    %cst_22 = arith.constant dense<0.000000e+00> : vector<8xf32>
    %91 = vector.multi_reduction <add>, %90, %cst_22 [1] : vector<8x128xf32> to vector<8xf32>
    %92 = vector.shape_cast %91 : vector<8xf32> to vector<8x1xf32>
    %cst_23 = arith.constant 1.280000e+02 : f32
    %93 = vector.broadcast %cst_23 : f32 to vector<8x1xf32>
    %94 = arith.divf %92, %93 : vector<8x1xf32>
    %95 = arith.mulf %90, %90 : vector<8x128xf32>
    %cst_24 = arith.constant dense<0.000000e+00> : vector<8xf32>
    %96 = vector.multi_reduction <add>, %95, %cst_24 [1] : vector<8x128xf32> to vector<8xf32>
    %97 = vector.shape_cast %96 : vector<8xf32> to vector<8x1xf32>
    %cst_25 = arith.constant 1.280000e+02 : f32
    %98 = vector.broadcast %cst_25 : f32 to vector<8x1xf32>
    %99 = arith.divf %97, %98 : vector<8x1xf32>
    %100 = arith.mulf %94, %94 : vector<8x1xf32>
    %101 = arith.subf %99, %100 : vector<8x1xf32>
    %102 = vector.broadcast %94 : vector<8x1xf32> to vector<8x128xf32>
    %103 = arith.subf %90, %102 : vector<8x128xf32>
    %cst_26 = arith.constant 9.99999974E-6 : f32
    %104 = vector.broadcast %cst_26 : f32 to vector<8x1xf32>
    %105 = arith.addf %101, %104 : vector<8x1xf32>
    %106 = math.rsqrt %105 : vector<8x1xf32>
    %107 = vector.broadcast %106 : vector<8x1xf32> to vector<8x128xf32>
    %108 = arith.mulf %103, %107 : vector<8x128xf32>
    %109 = vector.broadcast %6 : vector<1x128xf32> to vector<8x128xf32>
    %110 = arith.mulf %108, %109 : vector<8x128xf32>
    %111 = vector.broadcast %7 : vector<1x128xf32> to vector<8x128xf32>
    %112 = arith.addf %110, %111 : vector<8x128xf32>
    %cst_27 = arith.constant 0.000000e+00 : f32
    %113 = vector.shape_cast %10 : vector<8x1xi1> to vector<8x1xi1>
    %114 = vector.broadcast %113 : vector<8x1xi1> to vector<8x128xi1>
    %115 = vector.broadcast %cst_27 : f32 to vector<8x128xf32>
    %116 = arith.select %114, %112, %115 : vector<8x128xi1>, vector<8x128xf32>
    %c0_28 = arith.constant 0 : index
    %c0_29 = arith.constant 0 : index
    %117 = vector.load %arg7[%c0_28, %c0_29] : memref<8x128xf32, #tpu.memory_space<vmem>>, vector<8x128xf32>
    tpu.vector_store %arg7[%c0_28, %c0_29], %116 {strides = array<i32>} : memref<8x128xf32, #tpu.memory_space<vmem>>, vector<8x128xf32>,
    return
  }
  func.func @transform_0(%arg0: i32) -> (i32, i32) {
    %c0_i32 = arith.constant 0 : i32
    %c0_i32_0 = arith.constant 0 : i32
    return %arg0, %c0_i32 : i32, i32
  }
  func.func @transform_1(%arg0: i32) -> (i32, i32) {
    %c0_i32 = arith.constant 0 : i32
    %c0_i32_0 = arith.constant 0 : i32
    %c0_i32_1 = arith.constant 0 : i32
    return %c0_i32, %c0_i32_0 : i32, i32
  }
  func.func @transform_2(%arg0: i32) -> (i32, i32) {
    %c0_i32 = arith.constant 0 : i32
    %c0_i32_0 = arith.constant 0 : i32
    %c0_i32_1 = arith.constant 0 : i32
    return %c0_i32, %c0_i32_0 : i32, i32
  }
  func.func @transform_3(%arg0: i32) -> (i32, i32) {
    %c0_i32 = arith.constant 0 : i32
    %c0_i32_0 = arith.constant 0 : i32
    %c0_i32_1 = arith.constant 0 : i32
    return %c0_i32, %c0_i32_0 : i32, i32
  }
  func.func @transform_4(%arg0: i32) -> (i32, i32) {
    %c0_i32 = arith.constant 0 : i32
    %c0_i32_0 = arith.constant 0 : i32
    %c0_i32_1 = arith.constant 0 : i32
    return %c0_i32, %c0_i32_0 : i32, i32
  }
  func.func @transform_5(%arg0: i32) -> (i32, i32) {
    %c0_i32 = arith.constant 0 : i32
    %c0_i32_0 = arith.constant 0 : i32
    %c0_i32_1 = arith.constant 0 : i32
    return %c0_i32, %c0_i32_0 : i32, i32
  }
  func.func @transform_6(%arg0: i32) -> (i32, i32) {
    %c0_i32 = arith.constant 0 : i32
    %c0_i32_0 = arith.constant 0 : i32
    return %arg0, %c0_i32 : i32, i32
  }
}

</mosaic_0001>

<llo_original>
// kernel: _run_kernel.1
$region0: #{_run_kernel.1}
  #allocation0 [shape = 'u32[]', space=smem, size = 0x4, offset = 0x4, fixed_abs, tag = 'smem constant byte address 0x4 - core index']
  #allocation1 [shape = 'u32[144,128]{1,0:T(1,128)}', space=vmem, size = 0x12000, scoped, tag = 'internal scratch']
  %s0 = inlined_call_operand.vmem [shape: f32[16,6], index: 0, kind: input, shape index: {}]
  %s1 = inlined_call_operand.vmem [shape: f32[6,128], index: 1, kind: input, shape index: {}]
  %s2 = inlined_call_operand.vmem [shape: f32[8,128], index: 2, kind: input, shape index: {}]
  %s3 = inlined_call_operand.vmem [shape: bf16[128,256], index: 3, kind: input, shape index: {}]
  %s4 = inlined_call_operand.vmem [shape: f32[1,256], index: 4, kind: input, shape index: {}]
  %s5 = inlined_call_operand.vmem [shape: bf16[256,128], index: 5, kind: input, shape index: {}]
  %s6 = inlined_call_operand.hbm [shape: f32[16,128], index: 6, kind: output, shape index: {}]
  %s7 = sld [smem:[#allocation0]]
  $region57: #{_run_kernel.1} parent=0
    _
  %s9 = ssub.s32 1, %s7
  %s10 = scalar_select 0, %s9, %s7
  $region1: #{_run_kernel.1} parent=0
    #allocation2 [shape = 'u8[8192]{0}', space=vmem, size = 0x2000, scoped, tag = 'output window, operand 0']
    #allocation3 [shape = 's32[2]{0}', space=sflag, size = 0x8, scoped, tag = 'scoped memory for _run_kernel.1']
    %11 = vsyncpa [#allocation3], 0
    %s12 = scalar_lea.sflag [#allocation3], 1
    %13 = vsyncpa %s12, 0
    loop: start=0, step=1, limit=4
    $region2: #{_run_kernel.1} parent=1 // loop_pre_header
      _
    $region3: #{_run_kernel.1} parent=1 // loop_header
      %s15 = sphi 0, %s19
      %p16 = scmp.ge.s32.totalorder %s15, 4
      %s25 = sphi 0, %s27
      %s28 = sphi 0, %s25
      %s29 = sphi 0, %s28
      %s45 = sphi 0, %s29
      %s49 = sphi 0, %s49
      %s51 = sphi 0, %s49
      %s52 = sphi 0, %s51
      %s66 = sphi 0, %s52
      %s70 = sphi 0, %s70
      %s72 = sphi 0, %s70
      %s73 = sphi 0, %s72
      %s87 = sphi 0, %s73
      %s91 = sphi 0, %s91
      %s93 = sphi 0, %s91
      %s94 = sphi 0, %s93
      %s108 = sphi 0, %s94
      %s112 = sphi 0, %s112
      %s114 = sphi 0, %s112
      %s115 = sphi 0, %s114
      %s129 = sphi 0, %s115
      %s133 = sphi 0, %s133
      %s135 = sphi 0, %s133
      %s136 = sphi 0, %s135
      %s150 = sphi 0, %s136
      %s156 = sphi 0, %s158
      %s159 = sphi 0, %s156
      %s160 = sphi 0, %s159
      %s176 = sphi 0, %s160
    $region4: #{_run_kernel.1} parent=1 // loop_header_branch
      %18 = sbr.rel (%p16) target = $region8
    $region5: #{_run_kernel.1} parent=1 // loop_body
      %s20 = ssub.s32 %s15, 1
      %s21 = ssub.s32 %s15, 2
      %s22 = sadd.s32 %s15, 1
      %s23 = ssub.s32 %s15, %s22
      %p24 = scmp.eq.s32.totalorder %s23, 0
      %s26 = sadd.s32 %s25, 1
      %s27 = scalar_select %p24, %s25, %s26
      %p30 = pneg %p24
      %p31 = scmp.eq.s32.totalorder %s15, 1
      %p32 = por %p30, %p31
      %p33 = scmp.ne.s32.totalorder %s25, %s28
      %p34 = scmp.eq.s32.totalorder %s15, 0
      %p35 = por %p33, %p34
      %p36 = scmp.ne.s32.totalorder %s25, %s28
      %p37 = scmp.eq.s32.totalorder %s20, 1
      %p38 = por %p36, %p37
      %p39 = scmp.ne.s32.totalorder %s28, %s29
      %p40 = scmp.eq.s32.totalorder %s20, 0
      %p41 = por %p39, %p40
      %p42 = scmp.ne.s32.totalorder %s28, %s29
      %p43 = scmp.eq.s32.totalorder %s21, 1
      %p44 = por %p42, %p43
      %p46 = scmp.ne.s32.totalorder %s29, %s45
      %p47 = scmp.eq.s32.totalorder %s21, 0
      %p48 = por %p46, %p47
      %s50 = sadd.s32 %s49, 1
      %p53 = scmp.eq.s32.totalorder %s15, 1
      %p54 = scmp.ne.s32.totalorder %s49, %s51
      %p55 = scmp.eq.s32.totalorder %s15, 0
      %p56 = por %p54, %p55
      %p57 = scmp.ne.s32.totalorder %s49, %s51
      %p58 = scmp.eq.s32.totalorder %s20, 1
      %p59 = por %p57, %p58
      %p60 = scmp.ne.s32.totalorder %s51, %s52
      %p61 = scmp.eq.s32.totalorder %s20, 0
      %p62 = por %p60, %p61
      %p63 = scmp.ne.s32.totalorder %s51, %s52
      %p64 = scmp.eq.s32.totalorder %s21, 1
      %p65 = por %p63, %p64
      %p67 = scmp.ne.s32.totalorder %s52, %s66
      %p68 = scmp.eq.s32.totalorder %s21, 0
      %p69 = por %p67, %p68
      %s71 = sadd.s32 %s70, 1
      %p74 = scmp.eq.s32.totalorder %s15, 1
      %p75 = scmp.ne.s32.totalorder %s70, %s72
      %p76 = scmp.eq.s32.totalorder %s15, 0
      %p77 = por %p75, %p76
      %p78 = scmp.ne.s32.totalorder %s70, %s72
      %p79 = scmp.eq.s32.totalorder %s20, 1
      %p80 = por %p78, %p79
      %p81 = scmp.ne.s32.totalorder %s72, %s73
      %p82 = scmp.eq.s32.totalorder %s20, 0
      %p83 = por %p81, %p82
      %p84 = scmp.ne.s32.totalorder %s72, %s73
      %p85 = scmp.eq.s32.totalorder %s21, 1
      %p86 = por %p84, %p85
      %p88 = scmp.ne.s32.totalorder %s73, %s87
      %p89 = scmp.eq.s32.totalorder %s21, 0
      %p90 = por %p88, %p89
      %s92 = sadd.s32 %s91, 1
      %p95 = scmp.eq.s32.totalorder %s15, 1
      %p96 = scmp.ne.s32.totalorder %s91, %s93
      %p97 = scmp.eq.s32.totalorder %s15, 0
      %p98 = por %p96, %p97
      %p99 = scmp.ne.s32.totalorder %s91, %s93
      %p100 = scmp.eq.s32.totalorder %s20, 1
      %p101 = por %p99, %p100
      %p102 = scmp.ne.s32.totalorder %s93, %s94
      %p103 = scmp.eq.s32.totalorder %s20, 0
      %p104 = por %p102, %p103
      %p105 = scmp.ne.s32.totalorder %s93, %s94
      %p106 = scmp.eq.s32.totalorder %s21, 1
      %p107 = por %p105, %p106
      %p109 = scmp.ne.s32.totalorder %s94, %s108
      %p110 = scmp.eq.s32.totalorder %s21, 0
      %p111 = por %p109, %p110
      %s113 = sadd.s32 %s112, 1
      %p116 = scmp.eq.s32.totalorder %s15, 1
      %p117 = scmp.ne.s32.totalorder %s112, %s114
      %p118 = scmp.eq.s32.totalorder %s15, 0
      %p119 = por %p117, %p118
      %p120 = scmp.ne.s32.totalorder %s112, %s114
      %p121 = scmp.eq.s32.totalorder %s20, 1
      %p122 = por %p120, %p121
      %p123 = scmp.ne.s32.totalorder %s114, %s115
      %p124 = scmp.eq.s32.totalorder %s20, 0
      %p125 = por %p123, %p124
      %p126 = scmp.ne.s32.totalorder %s114, %s115
      %p127 = scmp.eq.s32.totalorder %s21, 1
      %p128 = por %p126, %p127
      %p130 = scmp.ne.s32.totalorder %s115, %s129
      %p131 = scmp.eq.s32.totalorder %s21, 0
      %p132 = por %p130, %p131
      %s134 = sadd.s32 %s133, 1
      %p137 = scmp.eq.s32.totalorder %s15, 1
      %p138 = scmp.ne.s32.totalorder %s133, %s135
      %p139 = scmp.eq.s32.totalorder %s15, 0
      %p140 = por %p138, %p139
      %p141 = scmp.ne.s32.totalorder %s133, %s135
      %p142 = scmp.eq.s32.totalorder %s20, 1
      %p143 = por %p141, %p142
      %p144 = scmp.ne.s32.totalorder %s135, %s136
      %p145 = scmp.eq.s32.totalorder %s20, 0
      %p146 = por %p144, %p145
      %p147 = scmp.ne.s32.totalorder %s135, %s136
      %p148 = scmp.eq.s32.totalorder %s21, 1
      %p149 = por %p147, %p148
      %p151 = scmp.ne.s32.totalorder %s136, %s150
      %p152 = scmp.eq.s32.totalorder %s21, 0
      %p153 = por %p151, %p152
      %s154 = ssub.s32 %s15, %s22
      %p155 = scmp.eq.s32.totalorder %s154, 0
      %s157 = sadd.s32 %s156, 1
      %s158 = scalar_select %p155, %s156, %s157
      %p161 = pneg %p155
      %p162 = scmp.eq.s32.totalorder %s15, 1
      %p163 = por %p161, %p162
      %p164 = scmp.ne.s32.totalorder %s156, %s159
      %p165 = scmp.eq.s32.totalorder %s15, 0
      %p166 = por %p164, %p165
      %p167 = scmp.ne.s32.totalorder %s156, %s159
      %p168 = scmp.eq.s32.totalorder %s20, 1
      %p169 = por %p167, %p168
      %p170 = scmp.ne.s32.totalorder %s159, %s160
      %p171 = scmp.eq.s32.totalorder %s20, 0
      %p172 = por %p170, %p171
      %p173 = scmp.ne.s32.totalorder %s159, %s160
      %p174 = scmp.eq.s32.totalorder %s21, 1
      %p175 = por %p173, %p174
      %p177 = scmp.ne.s32.totalorder %s160, %s176
      %p178 = scmp.eq.s32.totalorder %s21, 0
      %p179 = por %p177, %p178
      %p180 = scmp.le.s32.totalorder 1, %s15
      %p181 = scmp.lt.s32.totalorder %s15, 3
      %p182 = pnand %p180, %p181
      %p183 = pneg %p182
      // Predicated region
      $region9: #{_run_kernel.1} parent=5 // pred_check
        _
      $region10: #{_run_kernel.1} parent=5 // pred_check_branch
        %185 = sbr.rel (%p182) target = $region12
      $region11: #{_run_kernel.1} parent=5 // pred_region
        %s186 = ssub.s32 %s15, 1
        // Predicated region
        $region13: #{_run_kernel.1} parent=11 // pred_check
          %p187 = pneg %p62
        $region14: #{_run_kernel.1} parent=11 // pred_check_branch
          %189 = sbr.rel (%p187) target = $region16
        $region15: #{_run_kernel.1} parent=11 // pred_region
          _
        $region16: #{_run_kernel.1} parent=11 // pred_fallthru
          _
        // Predicated region
        $region17: #{_run_kernel.1} parent=11 // pred_check
          %p190 = pneg %p83
        $region18: #{_run_kernel.1} parent=11 // pred_check_branch
          %192 = sbr.rel (%p190) target = $region20
        $region19: #{_run_kernel.1} parent=11 // pred_region
          _
        $region20: #{_run_kernel.1} parent=11 // pred_fallthru
          _
        // Predicated region
        $region21: #{_run_kernel.1} parent=11 // pred_check
          %p193 = pneg %p104
        $region22: #{_run_kernel.1} parent=11 // pred_check_branch
          %195 = sbr.rel (%p193) target = $region24
        $region23: #{_run_kernel.1} parent=11 // pred_region
          _
        $region24: #{_run_kernel.1} parent=11 // pred_fallthru
          _
        // Predicated region
        $region25: #{_run_kernel.1} parent=11 // pred_check
          %p196 = pneg %p125
        $region26: #{_run_kernel.1} parent=11 // pred_check_branch
          %198 = sbr.rel (%p196) target = $region28
        $region27: #{_run_kernel.1} parent=11 // pred_region
          _
        $region28: #{_run_kernel.1} parent=11 // pred_fallthru
          _
        // Predicated region
        $region29: #{_run_kernel.1} parent=11 // pred_check
          %p199 = pneg %p146
        $region30: #{_run_kernel.1} parent=11 // pred_check_branch
          %201 = sbr.rel (%p199) target = $region32
        $region31: #{_run_kernel.1} parent=11 // pred_region
          _
        $region32: #{_run_kernel.1} parent=11 // pred_fallthru
          _
      $region12: #{_run_kernel.1} parent=5 // pred_fallthru
        _
      %p202 = scmp.lt.s32.totalorder %s15, 2
      // Predicated region
      $region33: #{_run_kernel.1} parent=5 // pred_check
        %p203 = pneg %p202
      $region34: #{_run_kernel.1} parent=5 // pred_check_branch
        %205 = sbr.rel (%p203) target = $region36
      $region35: #{_run_kernel.1} parent=5 // pred_region
        // Predicated region
        $region37: #{_run_kernel.1} parent=35 // pred_check
          %p206 = pneg %p35
        $region38: #{_run_kernel.1} parent=35 // pred_check_branch
          %208 = sbr.rel (%p206) target = $region40
        $region39: #{_run_kernel.1} parent=35 // pred_region
          %p209 = scmp.lt.s32.totalorder %s15, 1
          %s210 = scalar_select %p209, %s15, 1
          %s211 = smul.addr %s210, 8
          %s212 = scalar_lea.vmem %s0, %s211
        $region40: #{_run_kernel.1} parent=35 // pred_fallthru
          _
      $region36: #{_run_kernel.1} parent=5 // pred_fallthru
        _
      %p213 = scmp.le.s32.totalorder 1, %s15
      %p214 = scmp.lt.s32.totalorder %s15, 3
      %p215 = pnand %p213, %p214
      %p216 = pneg %p215
      // Predicated region
      $region41: #{_run_kernel.1} parent=5 // pred_check
        _
      $region42: #{_run_kernel.1} parent=5 // pred_check_branch
        %218 = sbr.rel (%p215) target = $region44
      $region43: #{_run_kernel.1} parent=5 // pred_region
        %s219 = ssub.s32 %s15, 1
        %p220 = scmp.lt.s32.totalorder %s20, 1
        %s221 = scalar_select %p220, %s20, 1
        %s222 = smul.addr %s221, 8
        %s223 = scalar_lea.vmem %s0, %s222
        %p224 = pneg %p41
        %p225 = pneg %p38
        %p226 = pneg %p62
        %p227 = pneg %p59
        %p228 = pneg %p83
        %p229 = pneg %p80
        %p230 = pneg %p104
        %p231 = pneg %p101
        %p232 = pneg %p125
        %p233 = pneg %p122
        %p234 = pneg %p146
        %p235 = pneg %p143
        %p236 = pneg %p172
        %p237 = pneg %p169
        %s238 = sand.u32 %s159, 1
        %s239 = scalar_lea.sflag [#allocation3], %s238
        %s240 = sand.u32 %s159, 1
        %s241 = smul.addr %s240, 8
        %s242 = scalar_lea.vmem [#allocation2], %s241
        %p243 = scmp.lt.s32.totalorder %s20, 1
        %s244 = scalar_select %p243, %s20, 1
        %s245 = smul.addr %s244, 8
        %s246 = scalar_lea.vmem %s0, %s245
        %v248 = vld [vmem:[%s246] sm:$0xff]
        %v249 = vld [vmem:[%s2] sm:$0xff]
        %vm250 = vcmp.ne.f32.partialorder %v248, 0.0
        %v251 = vmax.f32 %v248, -5.0
        %v252 = vmin.f32 %v251, 5.0
        %v253 = vld [vmem:[%s1] sm:$0x3f]
        %255 = vset.pattern.permute.xlu0 0
        %256 = vperm.xlu0 %255, %v252
        %v257 = vpop.permute.xlu0 %256
        %v259 = vlaneseq
        %v260 = vshrl.u32 %v259, 7
        %v261 = vsub.s32 0, %v260
        %v262 = vrot.slane %v253, %v261
        %v263 = vmul.f32 %v257, %v262
        %v264 = vlaneseq
        %v265 = vshrl.u32 %v264, 7
        %v266 = vsub.s32 0, %v265
        %v267 = vrot.slane %v249, %v266
        %v268 = vadd.f32 %v267, %v263
        %269 = vset.pattern.permute.xlu0 1
        %270 = vperm.xlu0 %269, %v252
        %v271 = vpop.permute.xlu0 %270
        %v273 = vlaneseq
        %v274 = vshrl.u32 %v273, 7
        %v275 = vsub.s32 1, %v274
        %v276 = vrot.slane %v253, %v275
        %v277 = vmul.f32 %v271, %v276
        %v278 = vadd.f32 %v268, %v277
        %279 = vset.pattern.permute.xlu0 2
        %280 = vperm.xlu0 %279, %v252
        %v281 = vpop.permute.xlu0 %280
        %v283 = vlaneseq
        %v284 = vshrl.u32 %v283, 7
        %v285 = vsub.s32 2, %v284
        %v286 = vrot.slane %v253, %v285
        %v287 = vmul.f32 %v281, %v286
        %v288 = vadd.f32 %v278, %v287
        %289 = vset.pattern.permute.xlu0 3
        %290 = vperm.xlu0 %289, %v252
        %v291 = vpop.permute.xlu0 %290
        %v293 = vlaneseq
        %v294 = vshrl.u32 %v293, 7
        %v295 = vsub.s32 3, %v294
        %v296 = vrot.slane %v253, %v295
        %v297 = vmul.f32 %v291, %v296
        %v298 = vadd.f32 %v288, %v297
        %299 = vset.pattern.permute.xlu0 4
        %300 = vperm.xlu0 %299, %v252
        %v301 = vpop.permute.xlu0 %300
        %v303 = vlaneseq
        %v304 = vshrl.u32 %v303, 7
        %v305 = vsub.s32 4, %v304
        %v306 = vrot.slane %v253, %v305
        %v307 = vmul.f32 %v301, %v306
        %v308 = vadd.f32 %v298, %v307
        %309 = vset.pattern.permute.xlu0 5
        %310 = vperm.xlu0 %309, %v252
        %v311 = vpop.permute.xlu0 %310
        %v313 = vlaneseq
        %v314 = vshrl.u32 %v313, 7
        %v315 = vsub.s32 5, %v314
        %v316 = vrot.slane %v253, %v315
        %v317 = vmul.f32 %v311, %v316
        %v318 = vadd.f32 %v308, %v317
        %v319 = vmax.f32 %v318, 0.0
        %320 = vadd.xlane.f32.xlu0 %v319
        %v321 = vpop.xlane.xlu0 %320
        %v322 = vrcp.pop 128.0
        %v323 = vmul.f32 %v321, %v322
        %v324 = vmul.f32 %v319, %v319
        %325 = vadd.xlane.f32.xlu0 %v324
        %v326 = vpop.xlane.xlu0 %325
        %v327 = vmul.f32 %v326, %v322
        %v328 = vmul.f32 %v323, %v323
        %v329 = vsub.f32 %v327, %v328
        %v330 = vsub.f32 %v319, %v323
        %v331 = vadd.f32 %v329, 1e-05
        %v332 = vrsqrt.pop %v331
        %v333 = vmul.f32 %v330, %v332
        %v334 = vlaneseq
        %v335 = vshrl.u32 %v334, 7
        %v336 = vsub.s32 1, %v335
        %v337 = vrot.slane %v249, %v336
        %v338 = vmul.f32 %v333, %v337
        %v339 = vlaneseq
        %v340 = vshrl.u32 %v339, 7
        %v341 = vsub.s32 2, %v340
        %v342 = vrot.slane %v249, %v341
        %v343 = vadd.f32 %v338, %v342
        %v344 = vpack.c.bf16 %v343, %v343
        %v345 = vld [vmem:[%s3] sm:$0xff]
        %v346 = vld [vmem:[%s3 + $0x8] sm:$0xff]
        %v347 = vld [vmem:[%s3 + $0x10] sm:$0xff]
        %v348 = vld [vmem:[%s3 + $0x18] sm:$0xff]
        %v349 = vld [vmem:[%s3 + $0x20] sm:$0xff]
        %v350 = vld [vmem:[%s3 + $0x28] sm:$0xff]
        %v351 = vld [vmem:[%s3 + $0x30] sm:$0xff]
        %v352 = vld [vmem:[%s3 + $0x38] sm:$0xff]
        %v353 = vld [vmem:[%s3 + $0x40] sm:$0xff]
        %v354 = vld [vmem:[%s3 + $0x48] sm:$0xff]
        %v355 = vld [vmem:[%s3 + $0x50] sm:$0xff]
        %v356 = vld [vmem:[%s3 + $0x58] sm:$0xff]
        %v357 = vld [vmem:[%s3 + $0x60] sm:$0xff]
        %v358 = vld [vmem:[%s3 + $0x68] sm:$0xff]
        %v359 = vld [vmem:[%s3 + $0x70] sm:$0xff]
        %v360 = vld [vmem:[%s3 + $0x78] sm:$0xff]
        %v361 = vld [vmem:[%s4] sm:$0x3]
        %v363 = vlaneseq
        %v364 = vshrl.u32 %v363, 7
        %v365 = vsub.s32 0, %v364
        %v366 = vrot.slane %v361, %v365
        %v367 = vlaneseq
        %v368 = vshrl.u32 %v367, 7
        %v369 = vsub.s32 1, %v368
        %v370 = vrot.slane %v361, %v369
        %v389 = vunpack.c.l.b16 %v345
        %v390 = vunpack.c.h.b16 %v345
        %v391 = vunpack.c.l.b16 %v346
        %v392 = vunpack.c.h.b16 %v346
        %v393 = vunpack.c.l.b16 %v347
        %v394 = vunpack.c.h.b16 %v347
        %v395 = vunpack.c.l.b16 %v348
        %v396 = vunpack.c.h.b16 %v348
        %v397 = vunpack.c.l.b16 %v349
        %v398 = vunpack.c.h.b16 %v349
        %v399 = vunpack.c.l.b16 %v350
        %v400 = vunpack.c.h.b16 %v350
        %v401 = vunpack.c.l.b16 %v351
        %v402 = vunpack.c.h.b16 %v351
        %v403 = vunpack.c.l.b16 %v352
        %v404 = vunpack.c.h.b16 %v352
        %v405 = vunpack.c.l.b16 %v353
        %v406 = vunpack.c.h.b16 %v353
        %v407 = vunpack.c.l.b16 %v354
        %v408 = vunpack.c.h.b16 %v354
        %v409 = vunpack.c.l.b16 %v355
        %v410 = vunpack.c.h.b16 %v355
        %v411 = vunpack.c.l.b16 %v356
        %v412 = vunpack.c.h.b16 %v356
        %v413 = vunpack.c.l.b16 %v357
        %v414 = vunpack.c.h.b16 %v357
        %v415 = vunpack.c.l.b16 %v358
        %v416 = vunpack.c.h.b16 %v358
        %v417 = vunpack.c.l.b16 %v359
        %v418 = vunpack.c.h.b16 %v359
        %v419 = vunpack.c.l.b16 %v360
        %v420 = vunpack.c.h.b16 %v360
        %v421 = vpack.c.b16 %v391, %v389
        %v422 = vpack.c.b16 %v392, %v390
        %v423 = vpack.c.b16 %v395, %v393
        %v424 = vpack.c.b16 %v396, %v394
        %v425 = vpack.c.b16 %v399, %v397
        %v426 = vpack.c.b16 %v400, %v398
        %v427 = vpack.c.b16 %v403, %v401
        %v428 = vpack.c.b16 %v404, %v402
        %v429 = vpack.c.b16 %v407, %v405
        %v430 = vpack.c.b16 %v408, %v406
        %v431 = vpack.c.b16 %v411, %v409
        %v432 = vpack.c.b16 %v412, %v410
        %v433 = vpack.c.b16 %v415, %v413
        %v434 = vpack.c.b16 %v416, %v414
        %v435 = vpack.c.b16 %v419, %v417
        %v436 = vpack.c.b16 %v420, %v418
        %453 = vmatprep.subr.bf16.mxu0 %v422
        %454 = vmatpush1.bf16.msra.mxu0 %v421
        %455 = vmatprep.subr.bf16.mxu0 %v424
        %456 = vmatpush1.bf16.msra.mxu0 %v423
        %457 = vmatprep.subr.bf16.mxu0 %v426
        %458 = vmatpush1.bf16.msra.mxu0 %v425
        %459 = vmatprep.subr.bf16.mxu0 %v428
        %460 = vmatpush1.bf16.msra.mxu0 %v427
        %461 = vmatprep.subr.bf16.mxu0 %v430
        %462 = vmatpush1.bf16.msra.mxu0 %v429
        %463 = vmatprep.subr.bf16.mxu0 %v432
        %464 = vmatpush1.bf16.msra.mxu0 %v431
        %465 = vmatprep.subr.bf16.mxu0 %v434
        %466 = vmatpush1.bf16.msra.mxu0 %v433
        %467 = vmatprep.subr.bf16.mxu0 %v436
        %468 = vmatpush1.bf16.msra.mxu0 %v435
        %469 = vmatprep.subr.bf16.mxu0 0
        %470 = vmatpush1.bf16.msra.mxu0 0
        %471 = vmatprep.subr.bf16.mxu0 0
        %472 = vmatpush1.bf16.msra.mxu0 0
        %473 = vmatprep.subr.bf16.mxu0 0
        %474 = vmatpush1.bf16.msra.mxu0 0
        %475 = vmatprep.subr.bf16.mxu0 0
        %476 = vmatpush1.bf16.msra.mxu0 0
        %477 = vmatprep.subr.bf16.mxu0 0
        %478 = vmatpush1.bf16.msra.mxu0 0
        %479 = vmatprep.subr.bf16.mxu0 0
        %480 = vmatpush1.bf16.msra.mxu0 0
        %481 = vmatprep.subr.bf16.mxu0 0
        %482 = vmatpush1.bf16.msra.mxu0 0
        %483 = vmatprep.subr.bf16.mxu0 0
        %484 = vmatpush1.bf16.msra.mxu0 0
        %485 = vmatprep.mubr.bf16.mxu0 0
        %486 = vmatmul.mubr.bf16.gmra.mrb[0].mxu0 %v344
        %v487 = vpop.f32.mrb[0].mxu0
        %v488 = vadd.f32 %v366, %v487
        %v489 = vpop.f32.mrb[0].mxu0
        %v490 = vadd.f32 %v370, %v489
        %v491 = vpop.f32.mrb[0].mxu0
        %v492 = vpop.f32.mrb[0].mxu0
        %493 = vdwg.mxu0
        %v494 = vmax.f32 %v488, 0.0
        %v495 = vmax.f32 %v490, 0.0
        %v496 = vpack.c.bf16 %v494, %v494
        %v497 = vpack.c.bf16 %v495, %v495
        %v498 = vld [vmem:[%s5] sm:$0xf]
        %v499 = vld [vmem:[%s5 + $0x4] sm:$0xf]
        %v500 = vld [vmem:[%s5 + $0x8] sm:$0xf]
        %v501 = vld [vmem:[%s5 + $0xc] sm:$0xf]
        %v502 = vld [vmem:[%s5 + $0x10] sm:$0xf]
        %v503 = vld [vmem:[%s5 + $0x14] sm:$0xf]
        %v504 = vld [vmem:[%s5 + $0x18] sm:$0xf]
        %v505 = vld [vmem:[%s5 + $0x1c] sm:$0xf]
        %v506 = vld [vmem:[%s5 + $0x20] sm:$0xf]
        %v507 = vld [vmem:[%s5 + $0x24] sm:$0xf]
        %v508 = vld [vmem:[%s5 + $0x28] sm:$0xf]
        %v509 = vld [vmem:[%s5 + $0x2c] sm:$0xf]
        %v510 = vld [vmem:[%s5 + $0x30] sm:$0xf]
        %v511 = vld [vmem:[%s5 + $0x34] sm:$0xf]
        %v512 = vld [vmem:[%s5 + $0x38] sm:$0xf]
        %v513 = vld [vmem:[%s5 + $0x3c] sm:$0xf]
        %v514 = vld [vmem:[%s5 + $0x40] sm:$0xf]
        %v515 = vld [vmem:[%s5 + $0x44] sm:$0xf]
        %v516 = vld [vmem:[%s5 + $0x48] sm:$0xf]
        %v517 = vld [vmem:[%s5 + $0x4c] sm:$0xf]
        %v518 = vld [vmem:[%s5 + $0x50] sm:$0xf]
        %v519 = vld [vmem:[%s5 + $0x54] sm:$0xf]
        %v520 = vld [vmem:[%s5 + $0x58] sm:$0xf]
        %v521 = vld [vmem:[%s5 + $0x5c] sm:$0xf]
        %v522 = vld [vmem:[%s5 + $0x60] sm:$0xf]
        %v523 = vld [vmem:[%s5 + $0x64] sm:$0xf]
        %v524 = vld [vmem:[%s5 + $0x68] sm:$0xf]
        %v525 = vld [vmem:[%s5 + $0x6c] sm:$0xf]
        %v526 = vld [vmem:[%s5 + $0x70] sm:$0xf]
        %v527 = vld [vmem:[%s5 + $0x74] sm:$0xf]
        %v528 = vld [vmem:[%s5 + $0x78] sm:$0xf]
        %v529 = vld [vmem:[%s5 + $0x7c] sm:$0xf]
        %v530 = vlaneseq
        %v531 = vshrl.u32 %v530, 7
        %v532 = vsub.s32 3, %v531
        %v533 = vrot.slane %v249, %v532
        %v566 = vunpack.c.l.b16 %v498
        %v567 = vunpack.c.l.b16 %v499
        %v568 = vunpack.c.l.b16 %v500
        %v569 = vunpack.c.l.b16 %v501
        %v570 = vunpack.c.l.b16 %v502
        %v571 = vunpack.c.l.b16 %v503
        %v572 = vunpack.c.l.b16 %v504
        %v573 = vunpack.c.l.b16 %v505
        %v574 = vunpack.c.l.b16 %v506
        %v575 = vunpack.c.l.b16 %v507
        %v576 = vunpack.c.l.b16 %v508
        %v577 = vunpack.c.l.b16 %v509
        %v578 = vunpack.c.l.b16 %v510
        %v579 = vunpack.c.l.b16 %v511
        %v580 = vunpack.c.l.b16 %v512
        %v581 = vunpack.c.l.b16 %v513
        %v582 = vunpack.c.l.b16 %v514
        %v583 = vunpack.c.l.b16 %v515
        %v584 = vunpack.c.l.b16 %v516
        %v585 = vunpack.c.l.b16 %v517
        %v586 = vunpack.c.l.b16 %v518
        %v587 = vunpack.c.l.b16 %v519
        %v588 = vunpack.c.l.b16 %v520
        %v589 = vunpack.c.l.b16 %v521
        %v590 = vunpack.c.l.b16 %v522
        %v591 = vunpack.c.l.b16 %v523
        %v592 = vunpack.c.l.b16 %v524
        %v593 = vunpack.c.l.b16 %v525
        %v594 = vunpack.c.l.b16 %v526
        %v595 = vunpack.c.l.b16 %v527
        %v596 = vunpack.c.l.b16 %v528
        %v597 = vunpack.c.l.b16 %v529
        %v598 = vpack.c.b16 %v567, %v566
        %v599 = vpack.c.b16 %v569, %v568
        %v600 = vpack.c.b16 %v571, %v570
        %v601 = vpack.c.b16 %v573, %v572
        %v602 = vpack.c.b16 %v575, %v574
        %v603 = vpack.c.b16 %v577, %v576
        %v604 = vpack.c.b16 %v579, %v578
        %v605 = vpack.c.b16 %v581, %v580
        %v606 = vpack.c.b16 %v583, %v582
        %v607 = vpack.c.b16 %v585, %v584
        %v608 = vpack.c.b16 %v587, %v586
        %v609 = vpack.c.b16 %v589, %v588
        %v610 = vpack.c.b16 %v591, %v590
        %v611 = vpack.c.b16 %v593, %v592
        %v612 = vpack.c.b16 %v595, %v594
        %v613 = vpack.c.b16 %v597, %v596
        %630 = vmatprep.subr.bf16.mxu0 0
        %631 = vmatpush1.bf16.msra.mxu0 %v598
        %632 = vmatprep.subr.bf16.mxu0 0
        %633 = vmatpush1.bf16.msra.mxu0 %v599
        %634 = vmatprep.subr.bf16.mxu0 0
        %635 = vmatpush1.bf16.msra.mxu0 %v600
        %636 = vmatprep.subr.bf16.mxu0 0
        %637 = vmatpush1.bf16.msra.mxu0 %v601
        %638 = vmatprep.subr.bf16.mxu0 0
        %639 = vmatpush1.bf16.msra.mxu0 %v602
        %640 = vmatprep.subr.bf16.mxu0 0
        %641 = vmatpush1.bf16.msra.mxu0 %v603
        %642 = vmatprep.subr.bf16.mxu0 0
        %643 = vmatpush1.bf16.msra.mxu0 %v604
        %644 = vmatprep.subr.bf16.mxu0 0
        %645 = vmatpush1.bf16.msra.mxu0 %v605
        %646 = vmatprep.subr.bf16.mxu0 0
        %647 = vmatpush1.bf16.msra.mxu0 %v606
        %648 = vmatprep.subr.bf16.mxu0 0
        %649 = vmatpush1.bf16.msra.mxu0 %v607
        %650 = vmatprep.subr.bf16.mxu0 0
        %651 = vmatpush1.bf16.msra.mxu0 %v608
        %652 = vmatprep.subr.bf16.mxu0 0
        %653 = vmatpush1.bf16.msra.mxu0 %v609
        %654 = vmatprep.subr.bf16.mxu0 0
        %655 = vmatpush1.bf16.msra.mxu0 %v610
        %656 = vmatprep.subr.bf16.mxu0 0
        %657 = vmatpush1.bf16.msra.mxu0 %v611
        %658 = vmatprep.subr.bf16.mxu0 0
        %659 = vmatpush1.bf16.msra.mxu0 %v612
        %660 = vmatprep.subr.bf16.mxu0 0
        %661 = vmatpush1.bf16.msra.mxu0 %v613
        %662 = vmatprep.mubr.bf16.mxu0 %v497
        %663 = vmatmul.mubr.bf16.gmra.mrb[0].mxu0 %v496
        %v664 = vpop.f32.mrb[0].mxu0
        %v665 = vadd.f32 %v533, %v664
        %v666 = vpop.f32.mrb[0].mxu0
        %v667 = vpop.f32.mrb[0].mxu0
        %v668 = vpop.f32.mrb[0].mxu0
        %669 = vdwg.mxu0
        %v670 = vadd.f32 %v343, %v665
        %671 = vadd.xlane.f32.xlu0 %v670
        %v672 = vpop.xlane.xlu0 %671
        %v673 = vmul.f32 %v672, %v322
        %v674 = vmul.f32 %v670, %v670
        %675 = vadd.xlane.f32.xlu0 %v674
        %v676 = vpop.xlane.xlu0 %675
        %v677 = vmul.f32 %v676, %v322
        %v678 = vmul.f32 %v673, %v673
        %v679 = vsub.f32 %v677, %v678
        %v680 = vsub.f32 %v670, %v673
        %v681 = vadd.f32 %v679, 1e-05
        %v682 = vrsqrt.pop %v681
        %v683 = vmul.f32 %v680, %v682
        %v684 = vlaneseq
        %v685 = vshrl.u32 %v684, 7
        %v686 = vsub.s32 4, %v685
        %v687 = vrot.slane %v249, %v686
        %v688 = vmul.f32 %v683, %v687
        %v689 = vlaneseq
        %v690 = vshrl.u32 %v689, 7
        %v691 = vsub.s32 5, %v690
        %v692 = vrot.slane %v249, %v691
        %v693 = vadd.f32 %v688, %v692
        %v694 = vsel %vm250, 1, 0
        %695 = vset.pattern.permute.xlu0 0
        %696 = vperm.xlu0 %695, %v694
        %v697 = vpop.permute.xlu0 %696
        %vm698 = vcmp.eq.s32.totalorder %v697, 1
        %v699 = vsel %vm698, %v693, 0.0
        %700 = vst [vmem:[%s242] sm:$0xff] %v699
        %s701 = sand.u32 %s159, 1
        %s702 = scalar_lea.sflag [#allocation3], %s701
        %s703 = sand.u32 %s159, 1
        %s704 = smul.addr %s703, 8
        %s705 = scalar_lea.vmem [#allocation2], %s704
        // Predicated region
        $region45: #{_run_kernel.1} parent=43 // pred_check
          %p706 = pneg %p169
        $region46: #{_run_kernel.1} parent=43 // pred_check_branch
          %708 = sbr.rel (%p706) target = $region48
        $region47: #{_run_kernel.1} parent=43 // pred_region
          %s710 = ssub.s32 128, 128
          %711 = vsyncadd %s702, %s710
          %s712 = smul.addr %s20, 128
          %s713 = scalar_lea.hbm %s6, %s712
          %s715 = sshll.u32 %s705, 4
          %s716 = int_to_ptr.vmem [resolvable:$true] %s715
          %718 = dma.vmem_to_hbm [thread:$0]  %s716, 128, %s713, %s702
        $region48: #{_run_kernel.1} parent=43 // pred_fallthru
          _
      $region44: #{_run_kernel.1} parent=5 // pred_fallthru
        _
      %p719 = scmp.le.s32.totalorder 2, %s15
      // Predicated region
      $region49: #{_run_kernel.1} parent=5 // pred_check
        %p720 = pneg %p719
      $region50: #{_run_kernel.1} parent=5 // pred_check_branch
        %722 = sbr.rel (%p720) target = $region52
      $region51: #{_run_kernel.1} parent=5 // pred_region
        %s723 = ssub.s32 %s15, 2
        // Predicated region
        $region53: #{_run_kernel.1} parent=51 // pred_check
          %p724 = pneg %p175
        $region54: #{_run_kernel.1} parent=51 // pred_check_branch
          %726 = sbr.rel (%p724) target = $region56
        $region55: #{_run_kernel.1} parent=51 // pred_region
          %s727 = sand.u32 %s160, 1
          %s728 = scalar_lea.sflag [#allocation3], %s727
          %s729 = sand.u32 %s160, 1
          %s730 = smul.addr %s729, 8
          %s731 = scalar_lea.vmem [#allocation2], %s730
          %732 = dma.done %s728, 128
        $region56: #{_run_kernel.1} parent=51 // pred_fallthru
          _
      $region52: #{_run_kernel.1} parent=5 // pred_fallthru
        _
    $region6: #{_run_kernel.1} parent=1 // loop_footer
      %s19 = sadd.s32 1, %s15
    $region7: #{_run_kernel.1} parent=1 // loop_footer_branch
      %14 = sbr.rel target = $region3
    $region8: #{_run_kernel.1} parent=1 // loop_exit
      _
    %733 = vsyncpa [#allocation3], 1
    %s734 = scalar_lea.sflag [#allocation3], 1
    %735 = vsyncpa %s734, 1

</llo_original>
